<compile_context>
chip_gen: v5e
topology: v5e:2x2
jax: 0.10.0
libtpu: 0.0.40
codegen_flags: <defaults>
</compile_context>

<pallas_src>
import jax
import jax.numpy as jnp
from jax import lax
from jax.experimental import pallas as pl
from jax.experimental.pallas import tpu as pltpu

FREQ = 257
HIDDEN = 512      # hidden_size in the PyTorch script
LSTM1_H = 400

VMEM_LIMIT = 64 * 1024 * 1024


def _round_up(x, m):
    return (x + m - 1) // m * m


# ---------------------------------------------------------------------------
# Kernel 1: fused  y = act((x @ w) [* scale] [+ bias]) ; bf16 in, f32 acc.
# ---------------------------------------------------------------------------
def _make_mm_kernel(act, has_scale, has_bias):
    def epilogue(acc, s, b):
        if s is not None:
            acc = acc * s
        if b is not None:
            acc = acc + b
        if act == "relu":
            acc = jnp.maximum(acc, 0.0)
        elif act == "sigmoid":
            acc = jax.nn.sigmoid(acc)
        return acc

    if has_scale and has_bias:
        def kernel(x_ref, w_ref, s_ref, b_ref, o_ref):
            acc = jnp.dot(x_ref[...], w_ref[...], preferred_element_type=jnp.float32)
            o_ref[...] = epilogue(acc, s_ref[...], b_ref[...]).astype(o_ref.dtype)
    elif has_bias:
        def kernel(x_ref, w_ref, b_ref, o_ref):
            acc = jnp.dot(x_ref[...], w_ref[...], preferred_element_type=jnp.float32)
            o_ref[...] = epilogue(acc, None, b_ref[...]).astype(o_ref.dtype)
    elif has_scale:
        def kernel(x_ref, w_ref, s_ref, o_ref):
            acc = jnp.dot(x_ref[...], w_ref[...], preferred_element_type=jnp.float32)
            o_ref[...] = epilogue(acc, s_ref[...], None).astype(o_ref.dtype)
    else:
        def kernel(x_ref, w_ref, o_ref):
            acc = jnp.dot(x_ref[...], w_ref[...], preferred_element_type=jnp.float32)
            o_ref[...] = epilogue(acc, None, None).astype(o_ref.dtype)
    return kernel


def matmul_act(x, w, scale=None, bias=None, act="none", out_dtype=jnp.bfloat16):
    """x:(M,K); w:(K,N) bf16 (pre-packed at init); scale/bias:(1,N) f32 or None."""
    M, K = x.shape
    K2, N = w.shape
    assert K == K2, (K, K2)
    x = x.astype(jnp.bfloat16)

    if M >= 1024:
        TM = 512
        Mp = _round_up(M, TM)
    else:
        Mp = _round_up(M, 8)
        TM = Mp
    if Mp != M:
        x = jnp.pad(x, ((0, Mp - M), (0, 0)))
    TN = 512 if (N % 512 == 0 and N > 512) else N

    in_specs = [pl.BlockSpec((TM, K), lambda i, j: (i, 0)),
                pl.BlockSpec((K, TN), lambda i, j: (0, j))]
    args = [x, w]
    if scale is not None:
        in_specs.append(pl.BlockSpec((1, TN), lambda i, j: (0, j)))
        args.append(scale)
    if bias is not None:
        in_specs.append(pl.BlockSpec((1, TN), lambda i, j: (0, j)))
        args.append(bias)

    out = pl.pallas_call(
        _make_mm_kernel(act, scale is not None, bias is not None),
        out_shape=jax.ShapeDtypeStruct((Mp, N), out_dtype),
        grid_spec=pltpu.PrefetchScalarGridSpec(
            num_scalar_prefetch=0,
            grid=(Mp // TM, N // TN),
            in_specs=in_specs,
            out_specs=pl.BlockSpec((TM, TN), lambda i, j: (i, j)),
        ),
        compiler_params=pltpu.CompilerParams(
            dimension_semantics=("parallel", "parallel"),
            vmem_limit_bytes=VMEM_LIMIT),
    )(*args)
    return out[:M] if Mp != M else out


# ---------------------------------------------------------------------------
# Kernel 2: dilated conv (stride 1, "same") with taps unrolled in-kernel,
# BN(eval)+ReLU epilogue, optional fused trailing 1x1 conv (+BN+ReLU).
# ---------------------------------------------------------------------------
def _make_conv_kernel(taps, dh, dw, F, C, TT, fuse2):
    def run(x_ref, w_ref, s_ref, b_ref, o_ref, acc_ref, w2_ref, s2_ref, b2_ref):
        tt = pl.program_id(1)

        def row(tl, carry):
            t = tt * TT + tl
            acc_ref[...] = jnp.zeros_like(acc_ref)
            for k, (i, j) in enumerate(taps):
                xs = x_ref[0, pl.ds(t + i * dh, 1), pl.ds(j * dw, F), :]
                xs = xs.reshape(F, C)
                wk = w_ref[pl.ds(k * C, C), :]
                acc_ref[...] += jnp.dot(xs, wk, preferred_element_type=jnp.float32)
            y = jnp.maximum(acc_ref[...] * s_ref[...] + b_ref[...], 0.0)
            if w2_ref is not None:
                y = jnp.dot(y.astype(jnp.bfloat16), w2_ref[...],
                            preferred_element_type=jnp.float32)
                y = jnp.maximum(y * s2_ref[...] + b2_ref[...], 0.0)
            o_ref[0, pl.ds(tl, 1)] = y[None].astype(o_ref.dtype)
            return carry

        lax.fori_loop(0, TT, row, 0)

    if fuse2:
        def kernel(x_ref, w_ref, s_ref, b_ref, w2_ref, s2_ref, b2_ref, o_ref, acc_ref):
            run(x_ref, w_ref, s_ref, b_ref, o_ref, acc_ref, w2_ref, s2_ref, b2_ref)
    else:
        def kernel(x_ref, w_ref, s_ref, b_ref, o_ref, acc_ref):
            run(x_ref, w_ref, s_ref, b_ref, o_ref, acc_ref, None, None, None)
    return kernel


def conv_pallas(x, layer, fuse=None):
    """x:(B,T,F,C) bf16 -> (B,T,F,Cout) bf16 (Cout=8 when fuse is given)."""
    B, T, F, C = x.shape
    kh, kw, dh, dw, ph, pw = layer["spec"]
    taps = tuple((i, j) for i in range(kh) for j in range(kw))
    xpad = jnp.pad(x, ((0, 0), (ph, ph), (pw, pw), (0, 0)))
    Tp, Fp = T + 2 * ph, F + 2 * pw
    Cout = layer["wmat"].shape[1]
    Cfin = fuse["wmat"].shape[1] if fuse is not None else Cout

    TT = 1
    for cand in (16, 8, 4, 2):
        if T % cand == 0:
            TT = cand
            break

    args = [xpad, layer["wmat"], layer["scale"], layer["bias"]]
    in_specs = [
        pl.BlockSpec((1, Tp, Fp, C), lambda b, t: (b, 0, 0, 0)),
        pl.BlockSpec(layer["wmat"].shape, lambda b, t: (0, 0)),
        pl.BlockSpec((1, Cout), lambda b, t: (0, 0)),
        pl.BlockSpec((1, Cout), lambda b, t: (0, 0)),
    ]
    if fuse is not None:
        args += [fuse["wmat"], fuse["scale"], fuse["bias"]]
        in_specs += [
            pl.BlockSpec(fuse["wmat"].shape, lambda b, t: (0, 0)),
            pl.BlockSpec((1, Cfin), lambda b, t: (0, 0)),
            pl.BlockSpec((1, Cfin), lambda b, t: (0, 0)),
        ]

    return pl.pallas_call(
        _make_conv_kernel(taps, dh, dw, F, C, TT, fuse is not None),
        out_shape=jax.ShapeDtypeStruct((B, T, F, Cfin), jnp.bfloat16),
        grid_spec=pltpu.PrefetchScalarGridSpec(
            num_scalar_prefetch=0,
            grid=(B, T // TT),
            in_specs=in_specs,
            out_specs=pl.BlockSpec((1, TT, F, Cfin), lambda b, t: (b, t, 0, 0)),
            scratch_shapes=[pltpu.VMEM((F, Cout), jnp.float32)],
        ),
        compiler_params=pltpu.CompilerParams(
            dimension_semantics=("parallel", "parallel"),
            vmem_limit_bytes=VMEM_LIMIT),
    )(*args)


def conv1_layer(x, layer):
    """First conv (cin=1, kernel (1,7)): tiny 7-tap expansion + fused matmul."""
    B, T, F = x.shape
    kh, kw, dh, dw, ph, pw = layer["spec"]
    xpad = jnp.pad(x, ((0, 0), (0, 0), (pw, pw)))
    cols = jnp.stack([xpad[:, :, j:j + F] for j in range(kw)], axis=-1)   # (B,T,F,7)
    y = matmul_act(cols.reshape(B * T * F, kw), layer["wmat"],
                   scale=layer["scale"], bias=layer["bias"], act="relu")
    return y.reshape(B, T, F, -1)


# ---------------------------------------------------------------------------
# Kernel 3: LSTM recurrence.  grid=(n_dir,) ("parallel" -> one TC per
# direction on v7x); time loop runs in-kernel, h/c carried in registers.
# Gate layout is PyTorch [i, f, g, o], each padded to Hp columns.
# ---------------------------------------------------------------------------
def _make_lstm_kernel(T, hp, relu_out):
    def kernel(xp_ref, whh_ref, o_ref):
        d = pl.program_id(0)             # 0 = forward, 1 = backward (time-reversed)
        nb = xp_ref.shape[2]

        def step(s, carry):
            h, c = carry
            tt = s + d * (T - 1 - 2 * s)         # fwd: s ; bwd: T-1-s
            x_t = xp_ref[0, pl.ds(tt, 1), :, :].reshape(nb, 4 * hp)
            gates = x_t.astype(jnp.float32) + jnp.dot(
                h.astype(jnp.bfloat16), whh_ref[0],
                preferred_element_type=jnp.float32)
            gi = jax.nn.sigmoid(gates[:, 0 * hp:1 * hp])
            gf = jax.nn.sigmoid(gates[:, 1 * hp:2 * hp])
            gg = jnp.tanh(gates[:, 2 * hp:3 * hp])
            go = jax.nn.sigmoid(gates[:, 3 * hp:4 * hp])
            c_new = gf * c + gi * gg
            h_new = go * jnp.tanh(c_new)
            out = jnp.maximum(h_new, 0.0) if relu_out else h_new
            o_ref[0, pl.ds(tt, 1)] = out[None].astype(o_ref.dtype)
            return h_new, c_new

        h0 = jnp.zeros((nb, hp), jnp.float32)
        c0 = jnp.zeros((nb, hp), jnp.float32)
        lax.fori_loop(0, T, step, (h0, c0))
    return kernel


def lstm_run(xp, whh, relu_out):
    """xp:(D,T,B,4Hp) bf16 (pre-projected x + bias); whh:(D,Hp,4Hp) bf16."""
    D, T, B, G = xp.shape
    hp = G // 4
    return pl.pallas_call(
        _make_lstm_kernel(T, hp, relu_out),
        out_shape=jax.ShapeDtypeStruct((D, T, B, hp), jnp.bfloat16),
        grid_spec=pltpu.PrefetchScalarGridSpec(
            num_scalar_prefetch=0,
            grid=(D,),
            in_specs=[
                pl.BlockSpec((1, T, B, G), lambda d: (d, 0, 0, 0)),
                pl.BlockSpec((1, hp, G), lambda d: (d, 0, 0)),
            ],
            out_specs=pl.BlockSpec((1, T, B, hp), lambda d: (d, 0, 0, 0)),
        ),
        compiler_params=pltpu.CompilerParams(
            dimension_semantics=("parallel",),
            vmem_limit_bytes=VMEM_LIMIT),
    )(xp.astype(jnp.bfloat16), whh)


# ---------------------------------------------------------------------------
# Deterministic parameter construction (synthetic weights, packed at init)
# ---------------------------------------------------------------------------
CONV_SPECS = [
    #  cin cout kh kw dh dw ph pw
    (1, 64, 1, 7, 1, 1, 0, 3),
    (64, 64, 7, 1, 1, 1, 3, 0),
    (64, 64, 5, 5, 1, 1, 2, 2),
    (64, 64, 5, 5, 3, 1, 6, 2),
    (64, 64, 5, 5, 5, 1, 10, 2),
    (64, 64, 5, 5, 13, 1, 26, 2),
    (64, 8, 1, 1, 1, 1, 0, 0),
]


def _normal(key, shape, std=0.05):
    return std * jax.random.normal(key, shape, dtype=jnp.float32)


def pack_conv(key_iter, cin, cout, kh, kw, dh, dw, ph, pw):
    w = _normal(next(key_iter), (cout, cin, kh, kw))
    b = _normal(next(key_iter), (cout,), 0.01)
    gamma = 1.0 + _normal(next(key_iter), (cout,), 0.01)
    beta = _normal(next(key_iter), (cout,), 0.01)
    rmean = _normal(next(key_iter), (cout,), 0.01)
    rvar = 1.0 + jnp.abs(_normal(next(key_iter), (cout,), 0.01))
    scale = gamma / jnp.sqrt(rvar + 1e-5)                    # fold BN (eval)
    bias = (b - rmean) * scale + beta
    wmat = jnp.transpose(w, (2, 3, 1, 0)).reshape(kh * kw * cin, cout)
    return dict(wmat=wmat.astype(jnp.bfloat16),
                scale=scale.reshape(1, cout),
                bias=bias.reshape(1, cout),
                spec=(kh, kw, dh, dw, ph, pw))


def pack_lstm(w_ih, w_hh, b, H, in_pad=None):
    """PyTorch (4H,in)/(4H,H) -> transposed, gate-padded bf16 matmul operands."""
    Hp = _round_up(H, 128)
    in_dim = w_ih.shape[1]
    ip = in_dim if in_pad is None else in_pad
    w_ih_t = jnp.zeros((ip, 4 * Hp), jnp.float32)
    w_hh_t = jnp.zeros((Hp, 4 * Hp), jnp.float32)
    b_p = jnp.zeros((1, 4 * Hp), jnp.float32)
    for k in range(4):
        w_ih_t = w_ih_t.at[:in_dim, k * Hp:k * Hp + H].set(w_ih[k * H:(k + 1) * H, :].T)
        w_hh_t = w_hh_t.at[:H, k * Hp:k * Hp + H].set(w_hh[k * H:(k + 1) * H, :].T)
        if b is not None:
            b_p = b_p.at[0, k * Hp:k * Hp + H].set(b[k * H:(k + 1) * H])
    return dict(w_ih_t=w_ih_t.astype(jnp.bfloat16),
                w_hh_t=w_hh_t.astype(jnp.bfloat16),
                b=(b_p if b is not None else None), H=H, Hp=Hp)


def init_params(key):
    keys = list(jax.random.split(key, 80))
    it = iter(keys)
    params = {}

    params["convs"] = [pack_conv(it, *spec) for spec in CONV_SPECS]

    # LSTM1: input 257*8 -> 400, biases initialized to 0 in the module.
    h1p = _round_up(LSTM1_H, 128)
    w_ih1 = _normal(next(it), (4 * LSTM1_H, FREQ * 8))
    # PyTorch flattens the CNN output as (channel, freq) -> column c*257+f; our
    # conv path emits (freq, channel) -> column f*8+c.  Permute the weight's
    # input columns once at init so no runtime transpose is needed.
    w_ih1 = w_ih1.reshape(4 * LSTM1_H, 8, FREQ).transpose(0, 2, 1)
    w_ih1 = w_ih1.reshape(4 * LSTM1_H, FREQ * 8)
    w_hh1 = _normal(next(it), (4 * LSTM1_H, LSTM1_H))
    p1 = pack_lstm(w_ih1, w_hh1, jnp.zeros((4 * LSTM1_H,), jnp.float32), LSTM1_H)
    params["lstm1"] = dict(w_ih_t=p1["w_ih_t"], b=p1["b"],
                           whh=p1["w_hh_t"][None], Hp=p1["Hp"])

    # lstm2 (input 400, zero-padded rows to 512) and lstm3 (input 1024),
    # bidirectional, no bias.  Forward/backward x-projections are packed into
    # one weight so they run as a single matmul.
    for tag, in_dim, in_pad in (("lstm2", LSTM1_H, h1p), ("lstm3", 2 * HIDDEN, None)):
        packs = []
        for _ in range(2):
            w_ih = _normal(next(it), (4 * HIDDEN, in_dim))
            w_hh = _normal(next(it), (4 * HIDDEN, HIDDEN))
            packs.append(pack_lstm(w_ih, w_hh, None, HIDDEN, in_pad=in_pad))
        params[tag] = dict(
            w_ih_t=jnp.concatenate([p["w_ih_t"] for p in packs], axis=1),
            whh=jnp.stack([p["w_hh_t"] for p in packs], axis=0),
            Hp=HIDDEN)

    # FC3: Linear(400, 600) + ReLU (bias init 0); input rows padded to 512.
    fc3_w = _normal(next(it), (600, LSTM1_H))
    params["fc3_w"] = (jnp.zeros((h1p, 600), jnp.float32)
                       .at[:LSTM1_H].set(fc3_w.T).astype(jnp.bfloat16))
    params["fc3_b"] = jnp.zeros((1, 600), jnp.float32)
    # FC4: Linear(600, 257), bias init 0.
    fc4_w = _normal(next(it), (FREQ, 600))
    params["fc4_w"] = fc4_w.T.astype(jnp.bfloat16)
    params["fc4_b"] = jnp.zeros((1, FREQ), jnp.float32)
    # fc: Linear(1024, 62, bias=False)
    fc_w = _normal(next(it), (62, 2 * HIDDEN))
    params["fc_w"] = fc_w.T.astype(jnp.bfloat16)
    return params


# ---------------------------------------------------------------------------
# Full forward pass
# ---------------------------------------------------------------------------
def voicefilter_forward(params, x):
    """x: (B, 1, T, 257) f32 NCHW. Returns (mask (B,T,257), out_6 (B,T,62))."""
    B, _, T, Fr = x.shape
    convs = params["convs"]

    h = conv1_layer(x[:, 0, :, :].astype(jnp.bfloat16), convs[0])   # (B,T,F,64)
    for layer in convs[1:5]:
        h = conv_pallas(h, layer)                                    # (B,T,F,64)
    h8 = conv_pallas(h, convs[5], fuse=convs[6])                     # (B,T,F,8)

    # Column order f*8+c; LSTM1 weight columns were permuted at init to match.
    out_real = h8.reshape(B * T, Fr * 8)

    # LSTM1 + ReLU -----------------------------------------------------------
    p1 = params["lstm1"]
    hp1 = p1["Hp"]
    xp1 = matmul_act(out_real, p1["w_ih_t"], bias=p1["b"], act="none")
    xp1 = xp1.reshape(B, T, 4 * hp1).transpose(1, 0, 2)[None]        # (1,T,B,4Hp)
    h1 = lstm_run(xp1, p1["whh"], relu_out=True)                     # (1,T,B,Hp)
    out3 = h1[0].transpose(1, 0, 2).reshape(B * T, hp1)              # cols>=400 are 0

    # mask branch: FC3 (dropout=identity, Linear+ReLU), FC4 (Linear), sigmoid
    hid3 = matmul_act(out3, params["fc3_w"], bias=params["fc3_b"], act="relu")
    mask = matmul_act(hid3, params["fc4_w"], bias=params["fc4_b"],
                      act="sigmoid", out_dtype=jnp.float32).reshape(B, T, Fr)

    # CTC branch: lstm2 (bi) + ReLU, lstm3 (bi) + ReLU, fc (no bias)
    feat = out3
    for tag in ("lstm2", "lstm3"):
        p = params[tag]
        hp = p["Hp"]
        xp = matmul_act(feat, p["w_ih_t"], act="none")               # (BT, 2*4Hp)
        xp = xp.reshape(B, T, 2, 4 * hp).transpose(2, 1, 0, 3)       # (2,T,B,4Hp)
        hbi = lstm_run(xp, p["whh"], relu_out=True)                  # (2,T,B,Hp)
        feat = jnp.concatenate([hbi[0], hbi[1]], axis=-1)            # (T,B,2Hp)
        feat = feat.transpose(1, 0, 2).reshape(B * T, 2 * hp)

    out6 = matmul_act(feat, params["fc_w"], act="none",
                      out_dtype=jnp.float32).reshape(B, T, 62)
    return mask, out6


if __name__ == "__main__":
    key = jax.random.PRNGKey(0)
    kp, kx = jax.random.split(key)
    params = init_params(kp)

    B, T = 2, 8
    x = jax.random.normal(kx, (B, 1, T, FREQ), dtype=jnp.float32)

    mask, out6 = voicefilter_forward(params, x)
    jax.block_until_ready((mask, out6))

    assert mask.shape == (B, T, FREQ), mask.shape
    assert out6.shape == (B, T, 62), out6.shape
    assert bool(jnp.all(jnp.isfinite(mask))) and bool(jnp.all(jnp.isfinite(out6)))
    print("KERNEL_OK")
</pallas_src>

<mosaic_0001>
module attributes {stable_mosaic.version = 11 : i64} {
  func.func @kernel(%arg0: i32, %arg1: i32, %arg2: memref<512x7xbf16, #tpu.memory_space<vmem>>, %arg3: memref<7x64xbf16, #tpu.memory_space<vmem>>, %arg4: memref<1x64xf32, #tpu.memory_space<vmem>>, %arg5: memref<1x64xf32, #tpu.memory_space<vmem>>, %arg6: memref<512x64xbf16, #tpu.memory_space<vmem>>) attributes {dimension_semantics = [#tpu.dimension_semantics<parallel>, #tpu.dimension_semantics<parallel>], iteration_bounds = array<i64: 9, 1>, scalar_prefetch = 0 : i64, scratch_operands = 0 : i64, tpu.core_type = #tpu.core_type<tc>, window_params = [{transform_indices = @transform_0, window_bounds = array<i64: 512, 7>}, {transform_indices = @transform_1, window_bounds = array<i64: 7, 64>}, {transform_indices = @transform_2, window_bounds = array<i64: 1, 64>}, {transform_indices = @transform_3, window_bounds = array<i64: 1, 64>}, {transform_indices = @transform_4, window_bounds = array<i64: 512, 64>}]} {
    %c0 = arith.constant 0 : index
    %c0_0 = arith.constant 0 : index
    %0 = vector.load %arg2[%c0, %c0_0] : memref<512x7xbf16, #tpu.memory_space<vmem>>, vector<512x7xbf16>
    %c0_1 = arith.constant 0 : index
    %c0_2 = arith.constant 0 : index
    %1 = vector.load %arg3[%c0_1, %c0_2] : memref<7x64xbf16, #tpu.memory_space<vmem>>, vector<7x64xbf16>
    %cst = arith.constant dense<0.000000e+00> : vector<512x64xf32>
    %2 = tpu.matmul %0, %1, %cst {dimension_numbers = #tpu.dot_dimension_numbers<[1], [0], [0], [1], [0, 0, 1, 1], [], []>} : vector<512x7xbf16>, vector<7x64xbf16>, vector<512x64xf32> -> vector<512x64xf32>
    %c0_3 = arith.constant 0 : index
    %c0_4 = arith.constant 0 : index
    %3 = vector.load %arg4[%c0_3, %c0_4] : memref<1x64xf32, #tpu.memory_space<vmem>>, vector<1x64xf32>
    %c0_5 = arith.constant 0 : index
    %c0_6 = arith.constant 0 : index
    %4 = vector.load %arg5[%c0_5, %c0_6] : memref<1x64xf32, #tpu.memory_space<vmem>>, vector<1x64xf32>
    %5 = vector.broadcast %3 : vector<1x64xf32> to vector<512x64xf32>
    %6 = arith.mulf %2, %5 : vector<512x64xf32>
    %7 = vector.broadcast %4 : vector<1x64xf32> to vector<512x64xf32>
    %8 = arith.addf %6, %7 : vector<512x64xf32>
    %cst_7 = arith.constant 0.000000e+00 : f32
    %9 = vector.broadcast %cst_7 : f32 to vector<512x64xf32>
    %10 = arith.maximumf %8, %9 : vector<512x64xf32>
    %11 = arith.truncf %10 : vector<512x64xf32> to vector<512x64xbf16>
    %c0_8 = arith.constant 0 : index
    %c0_9 = arith.constant 0 : index
    %12 = vector.load %arg6[%c0_8, %c0_9] : memref<512x64xbf16, #tpu.memory_space<vmem>>, vector<512x64xbf16>
    tpu.vector_store %arg6[%c0_8, %c0_9], %11 {strides = array<i32>} : memref<512x64xbf16, #tpu.memory_space<vmem>>, vector<512x64xbf16>,
    return
  }
  func.func @transform_0(%arg0: i32, %arg1: i32) -> (i32, i32) {
    %c0_i32 = arith.constant 0 : i32
    %c0_i32_0 = arith.constant 0 : i32
    return %arg0, %c0_i32 : i32, i32
  }
  func.func @transform_1(%arg0: i32, %arg1: i32) -> (i32, i32) {
    %c0_i32 = arith.constant 0 : i32
    %c0_i32_0 = arith.constant 0 : i32
    return %c0_i32, %arg1 : i32, i32
  }
  func.func @transform_2(%arg0: i32, %arg1: i32) -> (i32, i32) {
    %c0_i32 = arith.constant 0 : i32
    %c0_i32_0 = arith.constant 0 : i32
    return %c0_i32, %arg1 : i32, i32
  }
  func.func @transform_3(%arg0: i32, %arg1: i32) -> (i32, i32) {
    %c0_i32 = arith.constant 0 : i32
    %c0_i32_0 = arith.constant 0 : i32
    return %c0_i32, %arg1 : i32, i32
  }
  func.func @transform_4(%arg0: i32, %arg1: i32) -> (i32, i32) {
    %c0_i32 = arith.constant 0 : i32
    return %arg0, %arg1 : i32, i32
  }
}

</mosaic_0001>

<llo_original>
// kernel: tpu_custom_call.1
$region0: #{tpu_custom_call.1}
  #allocation0 [shape = 'u32[]', space=smem, size = 0x4, offset = 0x4, fixed_abs, tag = 'smem constant byte address 0x4 - core index']
  #allocation1 [shape = 'u32[72,128]{1,0:T(1,128)}', space=vmem, size = 0x9000, scoped, tag = 'internal scratch']
  %s0 = inlined_call_operand.vmem [shape: bf16[4608,7], index: 0, kind: input, shape index: {}]
  %s1 = inlined_call_operand.vmem [shape: bf16[7,64], index: 1, kind: input, shape index: {}]
  %s2 = inlined_call_operand.vmem [shape: f32[1,64], index: 2, kind: input, shape index: {}]
  %s3 = inlined_call_operand.vmem [shape: f32[1,64], index: 3, kind: input, shape index: {}]
  %s4 = inlined_call_operand.vmem [shape: bf16[4608,64], index: 4, kind: output, shape index: {}]
  %s5 = sld [smem:[#allocation0]]
  $region49: #{tpu_custom_call.1} parent=0
    _
  %s7 = ssub.s32 1, %s5
  %s8 = scalar_select 0, %s7, %s5
  loop: start=0, step=1, limit=11
  $region2: #{tpu_custom_call.1} parent=0 // loop_pre_header
    _
  $region3: #{tpu_custom_call.1} parent=0 // loop_header
    %s10 = sphi 0, %s14
    %p11 = scmp.ge.s32.totalorder %s10, 11
    %s17 = sphi 0, %s29
    %s18 = sphi 0, %s25
    %s19 = sphi 0, %s17
    %s20 = sphi 0, %s18
    %s21 = sphi 0, %s19
    %s22 = sphi 0, %s20
    %s32 = sphi 0, %s34
    %s35 = sphi 0, %s32
    %s36 = sphi 0, %s35
    %s52 = sphi 0, %s36
    %s58 = sphi 0, %s60
    %s61 = sphi 0, %s58
    %s62 = sphi 0, %s61
    %s78 = sphi 0, %s62
    %s84 = sphi 0, %s86
    %s87 = sphi 0, %s84
    %s88 = sphi 0, %s87
    %s104 = sphi 0, %s88
    %s110 = sphi 0, %s112
    %s113 = sphi 0, %s110
    %s114 = sphi 0, %s113
    %s130 = sphi 0, %s114
    %s138 = sphi 0, %s140
    %s141 = sphi 0, %s138
    %s142 = sphi 0, %s141
    %s158 = sphi 0, %s142
  $region4: #{tpu_custom_call.1} parent=0 // loop_header_branch
    %13 = sbr.rel (%p11) target = $region8
  $region5: #{tpu_custom_call.1} parent=0 // loop_body
    %s15 = ssub.s32 %s10, 1
    %s16 = ssub.s32 %s10, 2
    %s23 = sadd.s32 1, %s18
    %p24 = scmp.ge.s32.totalorder %s23, 1
    %s25 = scalar_select %p24, 0, %s23
    %s26 = sadd.s32 1, %s17
    %s27 = scalar_select %p24, %s26, %s17
    %p28 = scmp.ge.s32.totalorder %s27, 9
    %s29 = scalar_select %p28, 0, %s27
    %s30 = ssub.s32 %s17, %s29
    %p31 = scmp.eq.s32.totalorder %s30, 0
    %s33 = sadd.s32 %s32, 1
    %s34 = scalar_select %p31, %s32, %s33
    %p37 = pneg %p31
    %p38 = scmp.eq.s32.totalorder %s10, 8
    %p39 = por %p37, %p38
    %p40 = scmp.ne.s32.totalorder %s32, %s35
    %p41 = scmp.eq.s32.totalorder %s10, 0
    %p42 = por %p40, %p41
    %p43 = scmp.ne.s32.totalorder %s32, %s35
    %p44 = scmp.eq.s32.totalorder %s15, 8
    %p45 = por %p43, %p44
    %p46 = scmp.ne.s32.totalorder %s35, %s36
    %p47 = scmp.eq.s32.totalorder %s15, 0
    %p48 = por %p46, %p47
    %p49 = scmp.ne.s32.totalorder %s35, %s36
    %p50 = scmp.eq.s32.totalorder %s16, 8
    %p51 = por %p49, %p50
    %p53 = scmp.ne.s32.totalorder %s36, %s52
    %p54 = scmp.eq.s32.totalorder %s16, 0
    %p55 = por %p53, %p54
    %s56 = ssub.s32 %s18, %s25
    %p57 = scmp.eq.s32.totalorder %s56, 0
    %s59 = sadd.s32 %s58, 1
    %s60 = scalar_select %p57, %s58, %s59
    %p63 = pneg %p57
    %p64 = scmp.eq.s32.totalorder %s10, 8
    %p65 = por %p63, %p64
    %p66 = scmp.ne.s32.totalorder %s58, %s61
    %p67 = scmp.eq.s32.totalorder %s10, 0
    %p68 = por %p66, %p67
    %p69 = scmp.ne.s32.totalorder %s58, %s61
    %p70 = scmp.eq.s32.totalorder %s15, 8
    %p71 = por %p69, %p70
    %p72 = scmp.ne.s32.totalorder %s61, %s62
    %p73 = scmp.eq.s32.totalorder %s15, 0
    %p74 = por %p72, %p73
    %p75 = scmp.ne.s32.totalorder %s61, %s62
    %p76 = scmp.eq.s32.totalorder %s16, 8
    %p77 = por %p75, %p76
    %p79 = scmp.ne.s32.totalorder %s62, %s78
    %p80 = scmp.eq.s32.totalorder %s16, 0
    %p81 = por %p79, %p80
    %s82 = ssub.s32 %s18, %s25
    %p83 = scmp.eq.s32.totalorder %s82, 0
    %s85 = sadd.s32 %s84, 1
    %s86 = scalar_select %p83, %s84, %s85
    %p89 = pneg %p83
    %p90 = scmp.eq.s32.totalorder %s10, 8
    %p91 = por %p89, %p90
    %p92 = scmp.ne.s32.totalorder %s84, %s87
    %p93 = scmp.eq.s32.totalorder %s10, 0
    %p94 = por %p92, %p93
    %p95 = scmp.ne.s32.totalorder %s84, %s87
    %p96 = scmp.eq.s32.totalorder %s15, 8
    %p97 = por %p95, %p96
    %p98 = scmp.ne.s32.totalorder %s87, %s88
    %p99 = scmp.eq.s32.totalorder %s15, 0
    %p100 = por %p98, %p99
    %p101 = scmp.ne.s32.totalorder %s87, %s88
    %p102 = scmp.eq.s32.totalorder %s16, 8
    %p103 = por %p101, %p102
    %p105 = scmp.ne.s32.totalorder %s88, %s104
    %p106 = scmp.eq.s32.totalorder %s16, 0
    %p107 = por %p105, %p106
    %s108 = ssub.s32 %s18, %s25
    %p109 = scmp.eq.s32.totalorder %s108, 0
    %s111 = sadd.s32 %s110, 1
    %s112 = scalar_select %p109, %s110, %s111
    %p115 = pneg %p109
    %p116 = scmp.eq.s32.totalorder %s10, 8
    %p117 = por %p115, %p116
    %p118 = scmp.ne.s32.totalorder %s110, %s113
    %p119 = scmp.eq.s32.totalorder %s10, 0
    %p120 = por %p118, %p119
    %p121 = scmp.ne.s32.totalorder %s110, %s113
    %p122 = scmp.eq.s32.totalorder %s15, 8
    %p123 = por %p121, %p122
    %p124 = scmp.ne.s32.totalorder %s113, %s114
    %p125 = scmp.eq.s32.totalorder %s15, 0
    %p126 = por %p124, %p125
    %p127 = scmp.ne.s32.totalorder %s113, %s114
    %p128 = scmp.eq.s32.totalorder %s16, 8
    %p129 = por %p127, %p128
    %p131 = scmp.ne.s32.totalorder %s114, %s130
    %p132 = scmp.eq.s32.totalorder %s16, 0
    %p133 = por %p131, %p132
    %s134 = ssub.s32 %s17, %s29
    %s135 = ssub.s32 %s18, %s25
    %s136 = sor.u32 %s134, %s135
    %p137 = scmp.eq.s32.totalorder %s136, 0
    %s139 = sadd.s32 %s138, 1
    %s140 = scalar_select %p137, %s138, %s139
    %p143 = pneg %p137
    %p144 = scmp.eq.s32.totalorder %s10, 8
    %p145 = por %p143, %p144
    %p146 = scmp.ne.s32.totalorder %s138, %s141
    %p147 = scmp.eq.s32.totalorder %s10, 0
    %p148 = por %p146, %p147
    %p149 = scmp.ne.s32.totalorder %s138, %s141
    %p150 = scmp.eq.s32.totalorder %s15, 8
    %p151 = por %p149, %p150
    %p152 = scmp.ne.s32.totalorder %s141, %s142
    %p153 = scmp.eq.s32.totalorder %s15, 0
    %p154 = por %p152, %p153
    %p155 = scmp.ne.s32.totalorder %s141, %s142
    %p156 = scmp.eq.s32.totalorder %s16, 8
    %p157 = por %p155, %p156
    %p159 = scmp.ne.s32.totalorder %s142, %s158
    %p160 = scmp.eq.s32.totalorder %s16, 0
    %p161 = por %p159, %p160
    %p162 = scmp.le.s32.totalorder 1, %s10
    %p163 = scmp.lt.s32.totalorder %s10, 10
    %p164 = pnand %p162, %p163
    %p165 = pneg %p164
    // Predicated region
    $region9: #{tpu_custom_call.1} parent=5 // pred_check
      _
    $region10: #{tpu_custom_call.1} parent=5 // pred_check_branch
      %167 = sbr.rel (%p164) target = $region12
    $region11: #{tpu_custom_call.1} parent=5 // pred_region
      %s168 = ssub.s32 %s10, 1
      // Predicated region
      $region13: #{tpu_custom_call.1} parent=11 // pred_check
        %p169 = pneg %p74
      $region14: #{tpu_custom_call.1} parent=11 // pred_check_branch
        %171 = sbr.rel (%p169) target = $region16
      $region15: #{tpu_custom_call.1} parent=11 // pred_region
        %p172 = scmp.lt.s32.totalorder %s20, 0
        %s173 = scalar_select %p172, %s20, 0
        %s174 = smul.addr %s173, 4
        %s175 = scalar_lea.vmem %s1, %s174
      $region16: #{tpu_custom_call.1} parent=11 // pred_fallthru
        _
      // Predicated region
      $region17: #{tpu_custom_call.1} parent=11 // pred_check
        %p176 = pneg %p100
      $region18: #{tpu_custom_call.1} parent=11 // pred_check_branch
        %178 = sbr.rel (%p176) target = $region20
      $region19: #{tpu_custom_call.1} parent=11 // pred_region
        %p179 = scmp.lt.s32.totalorder %s20, 0
        %s180 = scalar_select %p179, %s20, 0
        %s181 = scalar_lea.vmem %s2, %s180
      $region20: #{tpu_custom_call.1} parent=11 // pred_fallthru
        _
      // Predicated region
      $region21: #{tpu_custom_call.1} parent=11 // pred_check
        %p182 = pneg %p126
      $region22: #{tpu_custom_call.1} parent=11 // pred_check_branch
        %184 = sbr.rel (%p182) target = $region24
      $region23: #{tpu_custom_call.1} parent=11 // pred_region
        %p185 = scmp.lt.s32.totalorder %s20, 0
        %s186 = scalar_select %p185, %s20, 0
        %s187 = scalar_lea.vmem %s3, %s186
      $region24: #{tpu_custom_call.1} parent=11 // pred_fallthru
        _
    $region12: #{tpu_custom_call.1} parent=5 // pred_fallthru
      _
    %p188 = scmp.lt.s32.totalorder %s10, 9
    // Predicated region
    $region25: #{tpu_custom_call.1} parent=5 // pred_check
      %p189 = pneg %p188
    $region26: #{tpu_custom_call.1} parent=5 // pred_check_branch
      %191 = sbr.rel (%p189) target = $region28
    $region27: #{tpu_custom_call.1} parent=5 // pred_region
      // Predicated region
      $region29: #{tpu_custom_call.1} parent=27 // pred_check
        %p192 = pneg %p42
      $region30: #{tpu_custom_call.1} parent=27 // pred_check_branch
        %194 = sbr.rel (%p192) target = $region32
      $region31: #{tpu_custom_call.1} parent=27 // pred_region
        %s195 = smul.u32 64, %s17
        %p196 = scmp.lt.s32.totalorder %s195, 575
        %s197 = scalar_select %p196, %s195, 575
        %s198 = smul.addr %s197, 4
        %s199 = scalar_lea.vmem %s0, %s198
        %s200 = smul.u32 64, %s17
      $region32: #{tpu_custom_call.1} parent=27 // pred_fallthru
        _
    $region28: #{tpu_custom_call.1} parent=5 // pred_fallthru
      _
    %p201 = scmp.le.s32.totalorder 1, %s10
    %p202 = scmp.lt.s32.totalorder %s10, 10
    %p203 = pnand %p201, %p202
    %p204 = pneg %p203
    // Predicated region
    $region33: #{tpu_custom_call.1} parent=5 // pred_check
      _
    $region34: #{tpu_custom_call.1} parent=5 // pred_check_branch
      %206 = sbr.rel (%p203) target = $region36
    $region35: #{tpu_custom_call.1} parent=5 // pred_region
      %s207 = ssub.s32 %s10, 1
      %s208 = smul.u32 64, %s19
      %p209 = scmp.lt.s32.totalorder %s208, 575
      %s210 = scalar_select %p209, %s208, 575
      %s211 = smul.addr %s210, 4
      %s212 = scalar_lea.vmem %s0, %s211
      %p213 = pneg %p48
      %p214 = pneg %p45
      %p215 = scmp.lt.s32.totalorder %s20, 0
      %s216 = scalar_select %p215, %s20, 0
      %s217 = smul.addr %s216, 4
      %s218 = scalar_lea.vmem %s1, %s217
      %p219 = pneg %p74
      %p220 = pneg %p71
      %p221 = scmp.lt.s32.totalorder %s20, 0
      %s222 = scalar_select %p221, %s20, 0
      %s223 = scalar_lea.vmem %s2, %s222
      %p224 = pneg %p100
      %p225 = pneg %p97
      %p226 = scmp.lt.s32.totalorder %s20, 0
      %s227 = scalar_select %p226, %s20, 0
      %s228 = scalar_lea.vmem %s3, %s227
      %p229 = pneg %p126
      %p230 = pneg %p123
      %p231 = pneg %p154
      %p232 = pneg %p151
      %s233 = smul.u32 64, %s19
      %p234 = scmp.lt.s32.totalorder %s233, 575
      %s235 = scalar_select %p234, %s233, 575
      %p236 = scmp.lt.s32.totalorder %s20, 0
      %s237 = scalar_select %p236, %s20, 0
      %s238 = sadd.s32 %s237, %s235
      %s239 = smul.addr %s238, 4
      %s240 = scalar_lea.vmem %s4, %s239
      %s241 = smul.u32 64, %s19
      %p242 = scmp.lt.s32.totalorder %s241, 575
      %s243 = scalar_select %p242, %s241, 575
      %s244 = smul.addr %s243, 4
      %s245 = scalar_lea.vmem %s0, %s244
      %s246 = smul.u32 64, %s19
      %p247 = scmp.lt.s32.totalorder %s20, 0
      %s248 = scalar_select %p247, %s20, 0
      %s249 = smul.addr %s248, 4
      %s250 = scalar_lea.vmem %s1, %s249
      %p251 = scmp.lt.s32.totalorder %s20, 0
      %s252 = scalar_select %p251, %s20, 0
      %s253 = scalar_lea.vmem %s2, %s252
      %p254 = scmp.lt.s32.totalorder %s20, 0
      %s255 = scalar_select %p254, %s20, 0
      %s256 = scalar_lea.vmem %s3, %s255
      %s257 = smul.u32 64, %s19
      %p258 = scmp.lt.s32.totalorder %s257, 575
      %s259 = scalar_select %p258, %s257, 575
      %p260 = scmp.lt.s32.totalorder %s20, 0
      %s261 = scalar_select %p260, %s20, 0
      %s262 = sadd.s32 %s261, %s259
      %s263 = smul.addr %s262, 4
      %s264 = scalar_lea.vmem %s4, %s263
      %s265 = smul.u32 64, %s19
      %v267 = vld [vmem:[%s245] sm:$0xf]
      %v268 = vld [vmem:[%s245 + $0x4] sm:$0xf]
      %v269 = vld [vmem:[%s245 + $0x8] sm:$0xf]
      %v270 = vld [vmem:[%s245 + $0xc] sm:$0xf]
      %v271 = vld [vmem:[%s245 + $0x10] sm:$0xf]
      %v272 = vld [vmem:[%s245 + $0x14] sm:$0xf]
      %v273 = vld [vmem:[%s245 + $0x18] sm:$0xf]
      %v274 = vld [vmem:[%s245 + $0x1c] sm:$0xf]
      %v275 = vld [vmem:[%s245 + $0x20] sm:$0xf]
      %v276 = vld [vmem:[%s245 + $0x24] sm:$0xf]
      %v277 = vld [vmem:[%s245 + $0x28] sm:$0xf]
      %v278 = vld [vmem:[%s245 + $0x2c] sm:$0xf]
      %v279 = vld [vmem:[%s245 + $0x30] sm:$0xf]
      %v280 = vld [vmem:[%s245 + $0x34] sm:$0xf]
      %v281 = vld [vmem:[%s245 + $0x38] sm:$0xf]
      %v282 = vld [vmem:[%s245 + $0x3c] sm:$0xf]
      %v283 = vld [vmem:[%s245 + $0x40] sm:$0xf]
      %v284 = vld [vmem:[%s245 + $0x44] sm:$0xf]
      %v285 = vld [vmem:[%s245 + $0x48] sm:$0xf]
      %v286 = vld [vmem:[%s245 + $0x4c] sm:$0xf]
      %v287 = vld [vmem:[%s245 + $0x50] sm:$0xf]
      %v288 = vld [vmem:[%s245 + $0x54] sm:$0xf]
      %v289 = vld [vmem:[%s245 + $0x58] sm:$0xf]
      %v290 = vld [vmem:[%s245 + $0x5c] sm:$0xf]
      %v291 = vld [vmem:[%s245 + $0x60] sm:$0xf]
      %v292 = vld [vmem:[%s245 + $0x64] sm:$0xf]
      %v293 = vld [vmem:[%s245 + $0x68] sm:$0xf]
      %v294 = vld [vmem:[%s245 + $0x6c] sm:$0xf]
      %v295 = vld [vmem:[%s245 + $0x70] sm:$0xf]
      %v296 = vld [vmem:[%s245 + $0x74] sm:$0xf]
      %v297 = vld [vmem:[%s245 + $0x78] sm:$0xf]
      %v298 = vld [vmem:[%s245 + $0x7c] sm:$0xf]
      %v299 = vld [vmem:[%s245 + $0x80] sm:$0xf]
      %v300 = vld [vmem:[%s245 + $0x84] sm:$0xf]
      %v301 = vld [vmem:[%s245 + $0x88] sm:$0xf]
      %v302 = vld [vmem:[%s245 + $0x8c] sm:$0xf]
      %v303 = vld [vmem:[%s245 + $0x90] sm:$0xf]
      %v304 = vld [vmem:[%s245 + $0x94] sm:$0xf]
      %v305 = vld [vmem:[%s245 + $0x98] sm:$0xf]
      %v306 = vld [vmem:[%s245 + $0x9c] sm:$0xf]
      %v307 = vld [vmem:[%s245 + $0xa0] sm:$0xf]
      %v308 = vld [vmem:[%s245 + $0xa4] sm:$0xf]
      %v309 = vld [vmem:[%s245 + $0xa8] sm:$0xf]
      %v310 = vld [vmem:[%s245 + $0xac] sm:$0xf]
      %v311 = vld [vmem:[%s245 + $0xb0] sm:$0xf]
      %v312 = vld [vmem:[%s245 + $0xb4] sm:$0xf]
      %v313 = vld [vmem:[%s245 + $0xb8] sm:$0xf]
      %v314 = vld [vmem:[%s245 + $0xbc] sm:$0xf]
      %v315 = vld [vmem:[%s245 + $0xc0] sm:$0xf]
      %v316 = vld [vmem:[%s245 + $0xc4] sm:$0xf]
      %v317 = vld [vmem:[%s245 + $0xc8] sm:$0xf]
      %v318 = vld [vmem:[%s245 + $0xcc] sm:$0xf]
      %v319 = vld [vmem:[%s245 + $0xd0] sm:$0xf]
      %v320 = vld [vmem:[%s245 + $0xd4] sm:$0xf]
      %v321 = vld [vmem:[%s245 + $0xd8] sm:$0xf]
      %v322 = vld [vmem:[%s245 + $0xdc] sm:$0xf]
      %v323 = vld [vmem:[%s245 + $0xe0] sm:$0xf]
      %v324 = vld [vmem:[%s245 + $0xe4] sm:$0xf]
      %v325 = vld [vmem:[%s245 + $0xe8] sm:$0xf]
      %v326 = vld [vmem:[%s245 + $0xec] sm:$0xf]
      %v327 = vld [vmem:[%s245 + $0xf0] sm:$0xf]
      %v328 = vld [vmem:[%s245 + $0xf4] sm:$0xf]
      %v329 = vld [vmem:[%s245 + $0xf8] sm:$0xf]
      %v330 = vld [vmem:[%s245 + $0xfc] sm:$0xf]
      %v331 = vld [vmem:[%s250] sm:$0xf]
      %v396 = vunpack.c.l.b16 %v267
      %v397 = vunpack.c.l.b16 %v268
      %v398 = vunpack.c.l.b16 %v269
      %v399 = vunpack.c.l.b16 %v270
      %v400 = vunpack.c.l.b16 %v271
      %v401 = vunpack.c.l.b16 %v272
      %v402 = vunpack.c.l.b16 %v273
      %v403 = vunpack.c.l.b16 %v274
      %v404 = vunpack.c.l.b16 %v275
      %v405 = vunpack.c.l.b16 %v276
      %v406 = vunpack.c.l.b16 %v277
      %v407 = vunpack.c.l.b16 %v278
      %v408 = vunpack.c.l.b16 %v279
      %v409 = vunpack.c.l.b16 %v280
      %v410 = vunpack.c.l.b16 %v281
      %v411 = vunpack.c.l.b16 %v282
      %v412 = vunpack.c.l.b16 %v283
      %v413 = vunpack.c.l.b16 %v284
      %v414 = vunpack.c.l.b16 %v285
      %v415 = vunpack.c.l.b16 %v286
      %v416 = vunpack.c.l.b16 %v287
      %v417 = vunpack.c.l.b16 %v288
      %v418 = vunpack.c.l.b16 %v289
      %v419 = vunpack.c.l.b16 %v290
      %v420 = vunpack.c.l.b16 %v291
      %v421 = vunpack.c.l.b16 %v292
      %v422 = vunpack.c.l.b16 %v293
      %v423 = vunpack.c.l.b16 %v294
      %v424 = vunpack.c.l.b16 %v295
      %v425 = vunpack.c.l.b16 %v296
      %v426 = vunpack.c.l.b16 %v297
      %v427 = vunpack.c.l.b16 %v298
      %v428 = vunpack.c.l.b16 %v299
      %v429 = vunpack.c.l.b16 %v300
      %v430 = vunpack.c.l.b16 %v301
      %v431 = vunpack.c.l.b16 %v302
      %v432 = vunpack.c.l.b16 %v303
      %v433 = vunpack.c.l.b16 %v304
      %v434 = vunpack.c.l.b16 %v305
      %v435 = vunpack.c.l.b16 %v306
      %v436 = vunpack.c.l.b16 %v307
      %v437 = vunpack.c.l.b16 %v308
      %v438 = vunpack.c.l.b16 %v309
      %v439 = vunpack.c.l.b16 %v310
      %v440 = vunpack.c.l.b16 %v311
      %v441 = vunpack.c.l.b16 %v312
      %v442 = vunpack.c.l.b16 %v313
      %v443 = vunpack.c.l.b16 %v314
      %v444 = vunpack.c.l.b16 %v315
      %v445 = vunpack.c.l.b16 %v316
      %v446 = vunpack.c.l.b16 %v317
      %v447 = vunpack.c.l.b16 %v318
      %v448 = vunpack.c.l.b16 %v319
      %v449 = vunpack.c.l.b16 %v320
      %v450 = vunpack.c.l.b16 %v321
      %v451 = vunpack.c.l.b16 %v322
      %v452 = vunpack.c.l.b16 %v323
      %v453 = vunpack.c.l.b16 %v324
      %v454 = vunpack.c.l.b16 %v325
      %v455 = vunpack.c.l.b16 %v326
      %v456 = vunpack.c.l.b16 %v327
      %v457 = vunpack.c.l.b16 %v328
      %v458 = vunpack.c.l.b16 %v329
      %v459 = vunpack.c.l.b16 %v330
      %v460 = vpack.c.b16 %v397, %v396
      %v461 = vpack.c.b16 %v399, %v398
      %v462 = vpack.c.b16 %v401, %v400
      %v463 = vpack.c.b16 %v403, %v402
      %v464 = vpack.c.b16 %v405, %v404
      %v465 = vpack.c.b16 %v407, %v406
      %v466 = vpack.c.b16 %v409, %v408
      %v467 = vpack.c.b16 %v411, %v410
      %v468 = vpack.c.b16 %v413, %v412
      %v469 = vpack.c.b16 %v415, %v414
      %v470 = vpack.c.b16 %v417, %v416
      %v471 = vpack.c.b16 %v419, %v418
      %v472 = vpack.c.b16 %v421, %v420
      %v473 = vpack.c.b16 %v423, %v422
      %v474 = vpack.c.b16 %v425, %v424
      %v475 = vpack.c.b16 %v427, %v426
      %v476 = vpack.c.b16 %v429, %v428
      %v477 = vpack.c.b16 %v431, %v430
      %v478 = vpack.c.b16 %v433, %v432
      %v479 = vpack.c.b16 %v435, %v434
      %v480 = vpack.c.b16 %v437, %v436
      %v481 = vpack.c.b16 %v439, %v438
      %v482 = vpack.c.b16 %v441, %v440
      %v483 = vpack.c.b16 %v443, %v442
      %v484 = vpack.c.b16 %v445, %v444
      %v485 = vpack.c.b16 %v447, %v446
      %v486 = vpack.c.b16 %v449, %v448
      %v487 = vpack.c.b16 %v451, %v450
      %v488 = vpack.c.b16 %v453, %v452
      %v489 = vpack.c.b16 %v455, %v454
      %v490 = vpack.c.b16 %v457, %v456
      %v491 = vpack.c.b16 %v459, %v458
      %vm492 = vcmask 56320
      %v494 = vsel %vm492, %v460, 0
      %v497 = vsel %vm492, %v461, 0
      %v500 = vsel %vm492, %v462, 0
      %v503 = vsel %vm492, %v463, 0
      %v506 = vsel %vm492, %v464, 0
      %v509 = vsel %vm492, %v465, 0
      %v512 = vsel %vm492, %v466, 0
      %v515 = vsel %vm492, %v467, 0
      %v518 = vsel %vm492, %v468, 0
      %v521 = vsel %vm492, %v469, 0
      %v524 = vsel %vm492, %v470, 0
      %v527 = vsel %vm492, %v471, 0
      %v530 = vsel %vm492, %v472, 0
      %v533 = vsel %vm492, %v473, 0
      %v536 = vsel %vm492, %v474, 0
      %v539 = vsel %vm492, %v475, 0
      %v542 = vsel %vm492, %v476, 0
      %v545 = vsel %vm492, %v477, 0
      %v548 = vsel %vm492, %v478, 0
      %v551 = vsel %vm492, %v479, 0
      %v554 = vsel %vm492, %v480, 0
      %v557 = vsel %vm492, %v481, 0
      %v560 = vsel %vm492, %v482, 0
      %v563 = vsel %vm492, %v483, 0
      %v566 = vsel %vm492, %v484, 0
      %v569 = vsel %vm492, %v485, 0
      %v572 = vsel %vm492, %v486, 0
      %v575 = vsel %vm492, %v487, 0
      %v578 = vsel %vm492, %v488, 0
      %v581 = vsel %vm492, %v489, 0
      %v584 = vsel %vm492, %v490, 0
      %v587 = vsel %vm492, %v491, 0
      %vm589 = vcmask 1042432
      %vm590 = vcmask 1043456
      %v591 = vsel %vm589, 4294967295, 65535
      %v592 = vsel %vm590, %v591, 0
      %v594 = vand.u32 %v331, %v592
      %596 = vmatpush.bf16.msra.mxu0 0
      %597 = vmatpush.bf16.msra.mxu0 0
      %598 = vmatpush.bf16.msra.mxu0 0
      %599 = vmatpush.bf16.msra.mxu0 0
      %600 = vmatpush.bf16.msra.mxu0 0
      %601 = vmatpush.bf16.msra.mxu0 0
      %602 = vmatpush.bf16.msra.mxu0 0
      %603 = vmatpush.bf16.msra.mxu0 %v594
      %604 = vmatmul.bf16.gmra.mxu0 %v494
      %v605 = vpop.f32.mrf.mxu0
      %v606 = vadd.f32 0.0, %v605
      %v607 = vpop.f32.mrf.mxu0
      %v608 = vadd.f32 0.0, %v607
      %609 = vmatmul.bf16.gmra.mxu0 %v497
      %v610 = vpop.f32.mrf.mxu0
      %v611 = vadd.f32 0.0, %v610
      %v612 = vpop.f32.mrf.mxu0
      %v613 = vadd.f32 0.0, %v612
      %614 = vmatmul.bf16.gmra.mxu0 %v500
      %v615 = vpop.f32.mrf.mxu0
      %v616 = vadd.f32 0.0, %v615
      %v617 = vpop.f32.mrf.mxu0
      %v618 = vadd.f32 0.0, %v617
      %619 = vmatmul.bf16.gmra.mxu0 %v503
      %v620 = vpop.f32.mrf.mxu0
      %v621 = vadd.f32 0.0, %v620
      %v622 = vpop.f32.mrf.mxu0
      %v623 = vadd.f32 0.0, %v622
      %624 = vmatmul.bf16.gmra.mxu0 %v506
      %v625 = vpop.f32.mrf.mxu0
      %v626 = vadd.f32 0.0, %v625
      %v627 = vpop.f32.mrf.mxu0
      %v628 = vadd.f32 0.0, %v627
      %629 = vmatmul.bf16.gmra.mxu0 %v509
      %v630 = vpop.f32.mrf.mxu0
      %v631 = vadd.f32 0.0, %v630
      %v632 = vpop.f32.mrf.mxu0
      %v633 = vadd.f32 0.0, %v632
      %634 = vmatmul.bf16.gmra.mxu0 %v512
      %v635 = vpop.f32.mrf.mxu0
      %v636 = vadd.f32 0.0, %v635
      %v637 = vpop.f32.mrf.mxu0
      %v638 = vadd.f32 0.0, %v637
      %639 = vmatmul.bf16.gmra.mxu0 %v515
      %v640 = vpop.f32.mrf.mxu0
      %v641 = vadd.f32 0.0, %v640
      %v642 = vpop.f32.mrf.mxu0
      %v643 = vadd.f32 0.0, %v642
      %644 = vmatmul.bf16.gmra.mxu0 %v518
      %v645 = vpop.f32.mrf.mxu0
      %v646 = vadd.f32 0.0, %v645
      %v647 = vpop.f32.mrf.mxu0
      %v648 = vadd.f32 0.0, %v647
      %649 = vmatmul.bf16.gmra.mxu0 %v521
      %v650 = vpop.f32.mrf.mxu0
      %v651 = vadd.f32 0.0, %v650
      %v652 = vpop.f32.mrf.mxu0
      %v653 = vadd.f32 0.0, %v652
      %654 = vmatmul.bf16.gmra.mxu0 %v524
      %v655 = vpop.f32.mrf.mxu0
      %v656 = vadd.f32 0.0, %v655
      %v657 = vpop.f32.mrf.mxu0
      %v658 = vadd.f32 0.0, %v657
      %659 = vmatmul.bf16.gmra.mxu0 %v527
      %v660 = vpop.f32.mrf.mxu0
      %v661 = vadd.f32 0.0, %v660
      %v662 = vpop.f32.mrf.mxu0
      %v663 = vadd.f32 0.0, %v662
      %664 = vmatmul.bf16.gmra.mxu0 %v530
      %v665 = vpop.f32.mrf.mxu0
      %v666 = vadd.f32 0.0, %v665
      %v667 = vpop.f32.mrf.mxu0
      %v668 = vadd.f32 0.0, %v667
      %669 = vmatmul.bf16.gmra.mxu0 %v533
      %v670 = vpop.f32.mrf.mxu0
      %v671 = vadd.f32 0.0, %v670
      %v672 = vpop.f32.mrf.mxu0
      %v673 = vadd.f32 0.0, %v672
      %674 = vmatmul.bf16.gmra.mxu0 %v536
      %v675 = vpop.f32.mrf.mxu0
      %v676 = vadd.f32 0.0, %v675
      %v677 = vpop.f32.mrf.mxu0
      %v678 = vadd.f32 0.0, %v677
      %679 = vmatmul.bf16.gmra.mxu0 %v539
      %v680 = vpop.f32.mrf.mxu0
      %v681 = vadd.f32 0.0, %v680
      %v682 = vpop.f32.mrf.mxu0
      %v683 = vadd.f32 0.0, %v682
      %684 = vmatmul.bf16.gmra.mxu0 %v542
      %v685 = vpop.f32.mrf.mxu0
      %v686 = vadd.f32 0.0, %v685
      %v687 = vpop.f32.mrf.mxu0
      %v688 = vadd.f32 0.0, %v687
      %689 = vmatmul.bf16.gmra.mxu0 %v545
      %v690 = vpop.f32.mrf.mxu0
      %v691 = vadd.f32 0.0, %v690
      %v692 = vpop.f32.mrf.mxu0
      %v693 = vadd.f32 0.0, %v692
      %694 = vmatmul.bf16.gmra.mxu0 %v548
      %v695 = vpop.f32.mrf.mxu0
      %v696 = vadd.f32 0.0, %v695
      %v697 = vpop.f32.mrf.mxu0
      %v698 = vadd.f32 0.0, %v697
      %699 = vmatmul.bf16.gmra.mxu0 %v551
      %v700 = vpop.f32.mrf.mxu0
      %v701 = vadd.f32 0.0, %v700
      %v702 = vpop.f32.mrf.mxu0
      %v703 = vadd.f32 0.0, %v702
      %704 = vmatmul.bf16.gmra.mxu0 %v554
      %v705 = vpop.f32.mrf.mxu0
      %v706 = vadd.f32 0.0, %v705
      %v707 = vpop.f32.mrf.mxu0
      %v708 = vadd.f32 0.0, %v707
      %709 = vmatmul.bf16.gmra.mxu0 %v557
      %v710 = vpop.f32.mrf.mxu0
      %v711 = vadd.f32 0.0, %v710
      %v712 = vpop.f32.mrf.mxu0
      %v713 = vadd.f32 0.0, %v712
      %714 = vmatmul.bf16.gmra.mxu0 %v560
      %v715 = vpop.f32.mrf.mxu0
      %v716 = vadd.f32 0.0, %v715
      %v717 = vpop.f32.mrf.mxu0
      %v718 = vadd.f32 0.0, %v717
      %719 = vmatmul.bf16.gmra.mxu0 %v563
      %v720 = vpop.f32.mrf.mxu0
      %v721 = vadd.f32 0.0, %v720
      %v722 = vpop.f32.mrf.mxu0
      %v723 = vadd.f32 0.0, %v722
      %724 = vmatmul.bf16.gmra.mxu0 %v566
      %v725 = vpop.f32.mrf.mxu0
      %v726 = vadd.f32 0.0, %v725
      %v727 = vpop.f32.mrf.mxu0
      %v728 = vadd.f32 0.0, %v727
      %729 = vmatmul.bf16.gmra.mxu0 %v569
      %v730 = vpop.f32.mrf.mxu0
      %v731 = vadd.f32 0.0, %v730
      %v732 = vpop.f32.mrf.mxu0
      %v733 = vadd.f32 0.0, %v732
      %734 = vmatmul.bf16.gmra.mxu0 %v572
      %v735 = vpop.f32.mrf.mxu0
      %v736 = vadd.f32 0.0, %v735
      %v737 = vpop.f32.mrf.mxu0
      %v738 = vadd.f32 0.0, %v737
      %739 = vmatmul.bf16.gmra.mxu0 %v575
      %v740 = vpop.f32.mrf.mxu0
      %v741 = vadd.f32 0.0, %v740
      %v742 = vpop.f32.mrf.mxu0
      %v743 = vadd.f32 0.0, %v742
      %744 = vmatmul.bf16.gmra.mxu0 %v578
      %v745 = vpop.f32.mrf.mxu0
      %v746 = vadd.f32 0.0, %v745
      %v747 = vpop.f32.mrf.mxu0
      %v748 = vadd.f32 0.0, %v747
      %749 = vmatmul.bf16.gmra.mxu0 %v581
      %v750 = vpop.f32.mrf.mxu0
      %v751 = vadd.f32 0.0, %v750
      %v752 = vpop.f32.mrf.mxu0
      %v753 = vadd.f32 0.0, %v752
      %754 = vmatmul.bf16.gmra.mxu0 %v584
      %v755 = vpop.f32.mrf.mxu0
      %v756 = vadd.f32 0.0, %v755
      %v757 = vpop.f32.mrf.mxu0
      %v758 = vadd.f32 0.0, %v757
      %759 = vmatmul.bf16.gmra.mxu0 %v587
      %v760 = vpop.f32.mrf.mxu0
      %v761 = vadd.f32 0.0, %v760
      %v762 = vpop.f32.mrf.mxu0
      %v763 = vadd.f32 0.0, %v762
      %764 = vdwg.mxu0
      %v765 = vld [vmem:[%s253] sm:$0x1]
      %v766 = vld [vmem:[%s256] sm:$0x1]
      %v768 = vperm.slane %v765, 0
      %v770 = vmul.f32 %v606, %v768
      %v771 = vmul.f32 %v608, %v768
      %v772 = vmul.f32 %v611, %v768
      %v773 = vmul.f32 %v613, %v768
      %v774 = vmul.f32 %v616, %v768
      %v775 = vmul.f32 %v618, %v768
      %v776 = vmul.f32 %v621, %v768
      %v777 = vmul.f32 %v623, %v768
      %v778 = vmul.f32 %v626, %v768
      %v779 = vmul.f32 %v628, %v768
      %v780 = vmul.f32 %v631, %v768
      %v781 = vmul.f32 %v633, %v768
      %v782 = vmul.f32 %v636, %v768
      %v783 = vmul.f32 %v638, %v768
      %v784 = vmul.f32 %v641, %v768
      %v785 = vmul.f32 %v643, %v768
      %v786 = vmul.f32 %v646, %v768
      %v787 = vmul.f32 %v648, %v768
      %v788 = vmul.f32 %v651, %v768
      %v789 = vmul.f32 %v653, %v768
      %v790 = vmul.f32 %v656, %v768
      %v791 = vmul.f32 %v658, %v768
      %v792 = vmul.f32 %v661, %v768
      %v793 = vmul.f32 %v663, %v768
      %v794 = vmul.f32 %v666, %v768
      %v795 = vmul.f32 %v668, %v768
      %v796 = vmul.f32 %v671, %v768
      %v797 = vmul.f32 %v673, %v768
      %v798 = vmul.f32 %v676, %v768
      %v799 = vmul.f32 %v678, %v768
      %v800 = vmul.f32 %v681, %v768
      %v801 = vmul.f32 %v683, %v768
      %v802 = vmul.f32 %v686, %v768
      %v803 = vmul.f32 %v688, %v768
      %v804 = vmul.f32 %v691, %v768
      %v805 = vmul.f32 %v693, %v768
      %v806 = vmul.f32 %v696, %v768
      %v807 = vmul.f32 %v698, %v768
      %v808 = vmul.f32 %v701, %v768
      %v809 = vmul.f32 %v703, %v768
      %v810 = vmul.f32 %v706, %v768
      %v811 = vmul.f32 %v708, %v768
      %v812 = vmul.f32 %v711, %v768
      %v813 = vmul.f32 %v713, %v768
      %v814 = vmul.f32 %v716, %v768
      %v815 = vmul.f32 %v718, %v768
      %v816 = vmul.f32 %v721, %v768
      %v817 = vmul.f32 %v723, %v768
      %v818 = vmul.f32 %v726, %v768
      %v819 = vmul.f32 %v728, %v768
      %v820 = vmul.f32 %v731, %v768
      %v821 = vmul.f32 %v733, %v768
      %v822 = vmul.f32 %v736, %v768
      %v823 = vmul.f32 %v738, %v768
      %v824 = vmul.f32 %v741, %v768
      %v825 = vmul.f32 %v743, %v768
      %v826 = vmul.f32 %v746, %v768
      %v827 = vmul.f32 %v748, %v768
      %v828 = vmul.f32 %v751, %v768
      %v829 = vmul.f32 %v753, %v768
      %v830 = vmul.f32 %v756, %v768
      %v831 = vmul.f32 %v758, %v768
      %v832 = vmul.f32 %v761, %v768
      %v833 = vmul.f32 %v763, %v768
      %v835 = vperm.slane %v766, 0
      %v837 = vadd.f32 %v770, %v835
      %v838 = vadd.f32 %v771, %v835
      %v839 = vadd.f32 %v772, %v835
      %v840 = vadd.f32 %v773, %v835
      %v841 = vadd.f32 %v774, %v835
      %v842 = vadd.f32 %v775, %v835
      %v843 = vadd.f32 %v776, %v835
      %v844 = vadd.f32 %v777, %v835
      %v845 = vadd.f32 %v778, %v835
      %v846 = vadd.f32 %v779, %v835
      %v847 = vadd.f32 %v780, %v835
      %v848 = vadd.f32 %v781, %v835
      %v849 = vadd.f32 %v782, %v835
      %v850 = vadd.f32 %v783, %v835
      %v851 = vadd.f32 %v784, %v835
      %v852 = vadd.f32 %v785, %v835
      %v853 = vadd.f32 %v786, %v835
      %v854 = vadd.f32 %v787, %v835
      %v855 = vadd.f32 %v788, %v835
      %v856 = vadd.f32 %v789, %v835
      %v857 = vadd.f32 %v790, %v835
      %v858 = vadd.f32 %v791, %v835
      %v859 = vadd.f32 %v792, %v835
      %v860 = vadd.f32 %v793, %v835
      %v861 = vadd.f32 %v794, %v835
      %v862 = vadd.f32 %v795, %v835
      %v863 = vadd.f32 %v796, %v835
      %v864 = vadd.f32 %v797, %v835
      %v865 = vadd.f32 %v798, %v835
      %v866 = vadd.f32 %v799, %v835
      %v867 = vadd.f32 %v800, %v835
      %v868 = vadd.f32 %v801, %v835
      %v869 = vadd.f32 %v802, %v835
      %v870 = vadd.f32 %v803, %v835
      %v871 = vadd.f32 %v804, %v835
      %v872 = vadd.f32 %v805, %v835
      %v873 = vadd.f32 %v806, %v835
      %v874 = vadd.f32 %v807, %v835
      %v875 = vadd.f32 %v808, %v835
      %v876 = vadd.f32 %v809, %v835
      %v877 = vadd.f32 %v810, %v835
      %v878 = vadd.f32 %v811, %v835
      %v879 = vadd.f32 %v812, %v835
      %v880 = vadd.f32 %v813, %v835
      %v881 = vadd.f32 %v814, %v835
      %v882 = vadd.f32 %v815, %v835
      %v883 = vadd.f32 %v816, %v835
      %v884 = vadd.f32 %v817, %v835
      %v885 = vadd.f32 %v818, %v835
      %v886 = vadd.f32 %v819, %v835
      %v887 = vadd.f32 %v820, %v835
      %v888 = vadd.f32 %v821, %v835
      %v889 = vadd.f32 %v822, %v835
      %v890 = vadd.f32 %v823, %v835
      %v891 = vadd.f32 %v824, %v835
      %v892 = vadd.f32 %v825, %v835
      %v893 = vadd.f32 %v826, %v835
      %v894 = vadd.f32 %v827, %v835
      %v895 = vadd.f32 %v828, %v835
      %v896 = vadd.f32 %v829, %v835
      %v897 = vadd.f32 %v830, %v835
      %v898 = vadd.f32 %v831, %v835
      %v899 = vadd.f32 %v832, %v835
      %v900 = vadd.f32 %v833, %v835
      %v901 = vmax.f32 %v837, 0.0
      %v902 = vmax.f32 %v838, 0.0
      %v903 = vmax.f32 %v839, 0.0
      %v904 = vmax.f32 %v840, 0.0
      %v905 = vmax.f32 %v841, 0.0
      %v906 = vmax.f32 %v842, 0.0
      %v907 = vmax.f32 %v843, 0.0
      %v908 = vmax.f32 %v844, 0.0
      %v909 = vmax.f32 %v845, 0.0
      %v910 = vmax.f32 %v846, 0.0
      %v911 = vmax.f32 %v847, 0.0
      %v912 = vmax.f32 %v848, 0.0
      %v913 = vmax.f32 %v849, 0.0
      %v914 = vmax.f32 %v850, 0.0
      %v915 = vmax.f32 %v851, 0.0
      %v916 = vmax.f32 %v852, 0.0
      %v917 = vmax.f32 %v853, 0.0
      %v918 = vmax.f32 %v854, 0.0
      %v919 = vmax.f32 %v855, 0.0
      %v920 = vmax.f32 %v856, 0.0
      %v921 = vmax.f32 %v857, 0.0
      %v922 = vmax.f32 %v858, 0.0
      %v923 = vmax.f32 %v859, 0.0
      %v924 = vmax.f32 %v860, 0.0
      %v925 = vmax.f32 %v861, 0.0
      %v926 = vmax.f32 %v862, 0.0
      %v927 = vmax.f32 %v863, 0.0
      %v928 = vmax.f32 %v864, 0.0
      %v929 = vmax.f32 %v865, 0.0
      %v930 = vmax.f32 %v866, 0.0
      %v931 = vmax.f32 %v867, 0.0
      %v932 = vmax.f32 %v868, 0.0
      %v933 = vmax.f32 %v869, 0.0
      %v934 = vmax.f32 %v870, 0.0
      %v935 = vmax.f32 %v871, 0.0
      %v936 = vmax.f32 %v872, 0.0
      %v937 = vmax.f32 %v873, 0.0
      %v938 = vmax.f32 %v874, 0.0
      %v939 = vmax.f32 %v875, 0.0
      %v940 = vmax.f32 %v876, 0.0
      %v941 = vmax.f32 %v877, 0.0
      %v942 = vmax.f32 %v878, 0.0
      %v943 = vmax.f32 %v879, 0.0
      %v944 = vmax.f32 %v880, 0.0
      %v945 = vmax.f32 %v881, 0.0
      %v946 = vmax.f32 %v882, 0.0
      %v947 = vmax.f32 %v883, 0.0
      %v948 = vmax.f32 %v884, 0.0
      %v949 = vmax.f32 %v885, 0.0
      %v950 = vmax.f32 %v886, 0.0
      %v951 = vmax.f32 %v887, 0.0
      %v952 = vmax.f32 %v888, 0.0
      %v953 = vmax.f32 %v889, 0.0
      %v954 = vmax.f32 %v890, 0.0
      %v955 = vmax.f32 %v891, 0.0
      %v956 = vmax.f32 %v892, 0.0
      %v957 = vmax.f32 %v893, 0.0
      %v958 = vmax.f32 %v894, 0.0
      %v959 = vmax.f32 %v895, 0.0
      %v960 = vmax.f32 %v896, 0.0
      %v961 = vmax.f32 %v897, 0.0
      %v962 = vmax.f32 %v898, 0.0
      %v963 = vmax.f32 %v899, 0.0
      %v964 = vmax.f32 %v900, 0.0
      %v965 = vpack.c.bf16 %v901, %v901
      %v966 = vpack.c.bf16 %v902, %v902
      %v967 = vpack.c.bf16 %v903, %v903
      %v968 = vpack.c.bf16 %v904, %v904
      %v969 = vpack.c.bf16 %v905, %v905
      %v970 = vpack.c.bf16 %v906, %v906
      %v971 = vpack.c.bf16 %v907, %v907
      %v972 = vpack.c.bf16 %v908, %v908
      %v973 = vpack.c.bf16 %v909, %v909
      %v974 = vpack.c.bf16 %v910, %v910
      %v975 = vpack.c.bf16 %v911, %v911
      %v976 = vpack.c.bf16 %v912, %v912
      %v977 = vpack.c.bf16 %v913, %v913
      %v978 = vpack.c.bf16 %v914, %v914
      %v979 = vpack.c.bf16 %v915, %v915
      %v980 = vpack.c.bf16 %v916, %v916
      %v981 = vpack.c.bf16 %v917, %v917
      %v982 = vpack.c.bf16 %v918, %v918
      %v983 = vpack.c.bf16 %v919, %v919
      %v984 = vpack.c.bf16 %v920, %v920
      %v985 = vpack.c.bf16 %v921, %v921
      %v986 = vpack.c.bf16 %v922, %v922
      %v987 = vpack.c.bf16 %v923, %v923
      %v988 = vpack.c.bf16 %v924, %v924
      %v989 = vpack.c.bf16 %v925, %v925
      %v990 = vpack.c.bf16 %v926, %v926
      %v991 = vpack.c.bf16 %v927, %v927
      %v992 = vpack.c.bf16 %v928, %v928
      %v993 = vpack.c.bf16 %v929, %v929
      %v994 = vpack.c.bf16 %v930, %v930
      %v995 = vpack.c.bf16 %v931, %v931
      %v996 = vpack.c.bf16 %v932, %v932
      %v997 = vpack.c.bf16 %v933, %v933
      %v998 = vpack.c.bf16 %v934, %v934
      %v999 = vpack.c.bf16 %v935, %v935
      %v1000 = vpack.c.bf16 %v936, %v936
      %v1001 = vpack.c.bf16 %v937, %v937
      %v1002 = vpack.c.bf16 %v938, %v938
      %v1003 = vpack.c.bf16 %v939, %v939
      %v1004 = vpack.c.bf16 %v940, %v940
      %v1005 = vpack.c.bf16 %v941, %v941
      %v1006 = vpack.c.bf16 %v942, %v942
      %v1007 = vpack.c.bf16 %v943, %v943
      %v1008 = vpack.c.bf16 %v944, %v944
      %v1009 = vpack.c.bf16 %v945, %v945
      %v1010 = vpack.c.bf16 %v946, %v946
      %v1011 = vpack.c.bf16 %v947, %v947
      %v1012 = vpack.c.bf16 %v948, %v948
      %v1013 = vpack.c.bf16 %v949, %v949
      %v1014 = vpack.c.bf16 %v950, %v950
      %v1015 = vpack.c.bf16 %v951, %v951
      %v1016 = vpack.c.bf16 %v952, %v952
      %v1017 = vpack.c.bf16 %v953, %v953
      %v1018 = vpack.c.bf16 %v954, %v954
      %v1019 = vpack.c.bf16 %v955, %v955
      %v1020 = vpack.c.bf16 %v956, %v956
      %v1021 = vpack.c.bf16 %v957, %v957
      %v1022 = vpack.c.bf16 %v958, %v958
      %v1023 = vpack.c.bf16 %v959, %v959
      %v1024 = vpack.c.bf16 %v960, %v960
      %v1025 = vpack.c.bf16 %v961, %v961
      %v1026 = vpack.c.bf16 %v962, %v962
      %v1027 = vpack.c.bf16 %v963, %v963
      %v1028 = vpack.c.bf16 %v964, %v964
      %vm1029 = vcmask 519168
      %1030 = vst.msk [vmem:[%s264] sm:$0xf] %vm1029, %v965
      %1031 = vst.msk [vmem:[%s264 + $0x4] sm:$0xf] %vm1029, %v966
      %1032 = vst.msk [vmem:[%s264 + $0x8] sm:$0xf] %vm1029, %v967
      %1033 = vst.msk [vmem:[%s264 + $0xc] sm:$0xf] %vm1029, %v968
      %1034 = vst.msk [vmem:[%s264 + $0x10] sm:$0xf] %vm1029, %v969
      %1035 = vst.msk [vmem:[%s264 + $0x14] sm:$0xf] %vm1029, %v970
      %1036 = vst.msk [vmem:[%s264 + $0x18] sm:$0xf] %vm1029, %v971
      %1037 = vst.msk [vmem:[%s264 + $0x1c] sm:$0xf] %vm1029, %v972
      %1038 = vst.msk [vmem:[%s264 + $0x20] sm:$0xf] %vm1029, %v973
      %1039 = vst.msk [vmem:[%s264 + $0x24] sm:$0xf] %vm1029, %v974
      %1040 = vst.msk [vmem:[%s264 + $0x28] sm:$0xf] %vm1029, %v975
      %1041 = vst.msk [vmem:[%s264 + $0x2c] sm:$0xf] %vm1029, %v976
      %1042 = vst.msk [vmem:[%s264 + $0x30] sm:$0xf] %vm1029, %v977
      %1043 = vst.msk [vmem:[%s264 + $0x34] sm:$0xf] %vm1029, %v978
      %1044 = vst.msk [vmem:[%s264 + $0x38] sm:$0xf] %vm1029, %v979
      %1045 = vst.msk [vmem:[%s264 + $0x3c] sm:$0xf] %vm1029, %v980
      %1046 = vst.msk [vmem:[%s264 + $0x40] sm:$0xf] %vm1029, %v981
      %1047 = vst.msk [vmem:[%s264 + $0x44] sm:$0xf] %vm1029, %v982
      %1048 = vst.msk [vmem:[%s264 + $0x48] sm:$0xf] %vm1029, %v983
      %1049 = vst.msk [vmem:[%s264 + $0x4c] sm:$0xf] %vm1029, %v984
      %1050 = vst.msk [vmem:[%s264 + $0x50] sm:$0xf] %vm1029, %v985
      %1051 = vst.msk [vmem:[%s264 + $0x54] sm:$0xf] %vm1029, %v986
      %1052 = vst.msk [vmem:[%s264 + $0x58] sm:$0xf] %vm1029, %v987
      %1053 = vst.msk [vmem:[%s264 + $0x5c] sm:$0xf] %vm1029, %v988
      %1054 = vst.msk [vmem:[%s264 + $0x60] sm:$0xf] %vm1029, %v989
      %1055 = vst.msk [vmem:[%s264 + $0x64] sm:$0xf] %vm1029, %v990
      %1056 = vst.msk [vmem:[%s264 + $0x68] sm:$0xf] %vm1029, %v991
      %1057 = vst.msk [vmem:[%s264 + $0x6c] sm:$0xf] %vm1029, %v992
      %1058 = vst.msk [vmem:[%s264 + $0x70] sm:$0xf] %vm1029, %v993
      %1059 = vst.msk [vmem:[%s264 + $0x74] sm:$0xf] %vm1029, %v994
      %1060 = vst.msk [vmem:[%s264 + $0x78] sm:$0xf] %vm1029, %v995
      %1061 = vst.msk [vmem:[%s264 + $0x7c] sm:$0xf] %vm1029, %v996
      %1062 = vst.msk [vmem:[%s264 + $0x80] sm:$0xf] %vm1029, %v997
      %1063 = vst.msk [vmem:[%s264 + $0x84] sm:$0xf] %vm1029, %v998
      %1064 = vst.msk [vmem:[%s264 + $0x88] sm:$0xf] %vm1029, %v999
      %1065 = vst.msk [vmem:[%s264 + $0x8c] sm:$0xf] %vm1029, %v1000
      %1066 = vst.msk [vmem:[%s264 + $0x90] sm:$0xf] %vm1029, %v1001
      %1067 = vst.msk [vmem:[%s264 + $0x94] sm:$0xf] %vm1029, %v1002
      %1068 = vst.msk [vmem:[%s264 + $0x98] sm:$0xf] %vm1029, %v1003
      %1069 = vst.msk [vmem:[%s264 + $0x9c] sm:$0xf] %vm1029, %v1004
      %1070 = vst.msk [vmem:[%s264 + $0xa0] sm:$0xf] %vm1029, %v1005
      %1071 = vst.msk [vmem:[%s264 + $0xa4] sm:$0xf] %vm1029, %v1006
      %1072 = vst.msk [vmem:[%s264 + $0xa8] sm:$0xf] %vm1029, %v1007
      %1073 = vst.msk [vmem:[%s264 + $0xac] sm:$0xf] %vm1029, %v1008
      %1074 = vst.msk [vmem:[%s264 + $0xb0] sm:$0xf] %vm1029, %v1009
      %1075 = vst.msk [vmem:[%s264 + $0xb4] sm:$0xf] %vm1029, %v1010
      %1076 = vst.msk [vmem:[%s264 + $0xb8] sm:$0xf] %vm1029, %v1011
      %1077 = vst.msk [vmem:[%s264 + $0xbc] sm:$0xf] %vm1029, %v1012
      %1078 = vst.msk [vmem:[%s264 + $0xc0] sm:$0xf] %vm1029, %v1013
      %1079 = vst.msk [vmem:[%s264 + $0xc4] sm:$0xf] %vm1029, %v1014
      %1080 = vst.msk [vmem:[%s264 + $0xc8] sm:$0xf] %vm1029, %v1015
      %1081 = vst.msk [vmem:[%s264 + $0xcc] sm:$0xf] %vm1029, %v1016
      %1082 = vst.msk [vmem:[%s264 + $0xd0] sm:$0xf] %vm1029, %v1017
      %1083 = vst.msk [vmem:[%s264 + $0xd4] sm:$0xf] %vm1029, %v1018
      %1084 = vst.msk [vmem:[%s264 + $0xd8] sm:$0xf] %vm1029, %v1019
      %1085 = vst.msk [vmem:[%s264 + $0xdc] sm:$0xf] %vm1029, %v1020
      %1086 = vst.msk [vmem:[%s264 + $0xe0] sm:$0xf] %vm1029, %v1021
      %1087 = vst.msk [vmem:[%s264 + $0xe4] sm:$0xf] %vm1029, %v1022
      %1088 = vst.msk [vmem:[%s264 + $0xe8] sm:$0xf] %vm1029, %v1023
      %1089 = vst.msk [vmem:[%s264 + $0xec] sm:$0xf] %vm1029, %v1024
      %1090 = vst.msk [vmem:[%s264 + $0xf0] sm:$0xf] %vm1029, %v1025
      %1091 = vst.msk [vmem:[%s264 + $0xf4] sm:$0xf] %vm1029, %v1026
      %1092 = vst.msk [vmem:[%s264 + $0xf8] sm:$0xf] %vm1029, %v1027
      %1093 = vst.msk [vmem:[%s264 + $0xfc] sm:$0xf] %vm1029, %v1028
      %s1094 = smul.u32 64, %s19
      %p1095 = scmp.lt.s32.totalorder %s1094, 575
      %s1096 = scalar_select %p1095, %s1094, 575
      %p1097 = scmp.lt.s32.totalorder %s20, 0
      %s1098 = scalar_select %p1097, %s20, 0
      %s1099 = sadd.s32 %s1098, %s1096
      %s1100 = smul.addr %s1099, 4
      %s1101 = scalar_lea.vmem %s4, %s1100
      // Predicated region
      $region37: #{tpu_custom_call.1} parent=35 // pred_check
        %p1102 = pneg %p151
      $region38: #{tpu_custom_call.1} parent=35 // pred_check_branch
        %1104 = sbr.rel (%p1102) target = $region40
      $region39: #{tpu_custom_call.1} parent=35 // pred_region
        %s1105 = smul.u32 64, %s19
      $region40: #{tpu_custom_call.1} parent=35 // pred_fallthru
        _
    $region36: #{tpu_custom_call.1} parent=5 // pred_fallthru
      _
    %p1106 = scmp.le.s32.totalorder 2, %s10
    // Predicated region
    $region41: #{tpu_custom_call.1} parent=5 // pred_check
      %p1107 = pneg %p1106
    $region42: #{tpu_custom_call.1} parent=5 // pred_check_branch
      %1109 = sbr.rel (%p1107) target = $region44
    $region43: #{tpu_custom_call.1} parent=5 // pred_region
      %s1110 = ssub.s32 %s10, 2
      // Predicated region
      $region45: #{tpu_custom_call.1} parent=43 // pred_check
        %p1111 = pneg %p157
      $region46: #{tpu_custom_call.1} parent=43 // pred_check_branch
        %1113 = sbr.rel (%p1111) target = $region48
      $region47: #{tpu_custom_call.1} parent=43 // pred_region
        %s1114 = smul.u32 64, %s21
        %p1115 = scmp.lt.s32.totalorder %s1114, 575
        %s1116 = scalar_select %p1115, %s1114, 575
        %p1117 = scmp.lt.s32.totalorder %s22, 0
        %s1118 = scalar_select %p1117, %s22, 0
        %s1119 = sadd.s32 %s1118, %s1116
        %s1120 = smul.addr %s1119, 4
        %s1121 = scalar_lea.vmem %s4, %s1120
      $region48: #{tpu_custom_call.1} parent=43 // pred_fallthru
        _
    $region44: #{tpu_custom_call.1} parent=5 // pred_fallthru
      _
  $region6: #{tpu_custom_call.1} parent=0 // loop_footer
    %s14 = sadd.s32 1, %s10
  $region7: #{tpu_custom_call.1} parent=0 // loop_footer_branch
    %9 = sbr.rel target = $region3
  $region8: #{tpu_custom_call.1} parent=0 // loop_exit
    _

</llo_original>
